<compile_context>
chip_gen: v6e
topology: v6e:2x2x1
jax: 0.10.0
libtpu: 0.0.40
codegen_flags: <defaults>
</compile_context>

<pallas_src>
import functools

import jax
import jax.numpy as jnp
from jax.experimental import pallas as pl
from jax.experimental.pallas import tpu as pltpu

BN_EPS = 1e-5
NEG_LARGE = -1e30          # bias for padded class lanes -> exp() == 0
_VMEM_BUDGET = 20 << 20    # planning budget (conservative vs v7x 64 MiB)
_VMEM_LIMIT = 32 << 20     # scoped VMEM limit passed to Mosaic


def _round_up(x, m):
    return (x + m - 1) // m * m


# ---------------------------------------------------------------------------
# Pass 1: base = x @ W_base + b_base (accumulated directly into the resident
# output block), ReLU, masked per-B-tile one-pass BN partial stats.
# ---------------------------------------------------------------------------
def base_kernel(x_ref, wb_ref, bb_ref, base_ref, stats_ref, *, b_real):
    # Grid queries hoisted OUT of pl.when bodies (program_id has no lowering
    # inside a cond branch under interpret mode).
    k = pl.program_id(1)
    last_k = pl.num_programs(1) - 1
    row0 = pl.program_id(0) * base_ref.shape[0]

    @pl.when(k == 0)
    def _init():
        base_ref[...] = jnp.zeros_like(base_ref)

    # bf16 operands, f32 accumulation on the MXU, accumulate into the output
    # block itself (no scratch accumulator).
    base_ref[...] += jnp.dot(x_ref[...].astype(jnp.bfloat16), wb_ref[...],
                             preferred_element_type=jnp.float32)

    @pl.when(k == last_k)
    def _epilogue():
        base = base_ref[...] + bb_ref[...]
        base_ref[...] = base

        r = jnp.maximum(base, 0.0)
        tb, d = base.shape

        # Mask zero-padded batch rows so BN statistics cover the REAL batch
        # only (full-batch BatchNorm1d training semantics).
        rows = row0 + jax.lax.broadcasted_iota(jnp.int32, (tb, 1), 0)
        mask = (rows < b_real).astype(jnp.float32)
        rm = r * mask

        row_sum = jnp.sum(rm, axis=0, keepdims=True)      # (1, d)
        row_sq = jnp.sum(rm * r, axis=0, keepdims=True)    # (1, d) = sum(r^2, real rows)

        srow = jax.lax.broadcasted_iota(jnp.int32, (8, d), 0)
        stats_ref[...] = jnp.where(srow == 0, row_sum,
                                   jnp.where(srow == 1, row_sq, 0.0))


# ---------------------------------------------------------------------------
# Pass 2 (fused): BN affine + classifier matmul + softmax (lane-dense output).
# ---------------------------------------------------------------------------
def head_kernel(base_ref, scale_ref, shift_ref, wl_ref, bl_ref, out_ref):
    r = jnp.maximum(base_ref[...], 0.0)
    norm = r * scale_ref[...] + shift_ref[...]             # fused BN (1 mul + 1 add)
    logits = jnp.dot(norm.astype(wl_ref.dtype), wl_ref[...],
                     preferred_element_type=jnp.float32) + bl_ref[...]
    m = jnp.max(logits, axis=1, keepdims=True)
    e = jnp.exp(logits - m)                                 # padded classes -> 0
    out_ref[...] = (e / jnp.sum(e, axis=1, keepdims=True)).astype(out_ref.dtype)


# ---------------------------------------------------------------------------
# Pass 2 (fallback, very large n_classes): class-tiled logits only.
# TODO(synk): fuse an online-softmax across class tiles instead of the XLA
# softmax epilogue for very large n_classes.
# ---------------------------------------------------------------------------
def logits_kernel(base_ref, scale_ref, shift_ref, wl_ref, bl_ref, out_ref):
    r = jnp.maximum(base_ref[...], 0.0)
    norm = r * scale_ref[...] + shift_ref[...]
    out_ref[...] = (jnp.dot(norm.astype(wl_ref.dtype), wl_ref[...],
                            preferred_element_type=jnp.float32)
                    + bl_ref[...])


# ---------------------------------------------------------------------------
# One-time weight preparation (pad + bf16 cast hoisted out of the forward).
# ---------------------------------------------------------------------------
def prepare_params(params):
    f32, bf16 = jnp.float32, jnp.bfloat16
    w_base, b_base = params["w_base"], params["b_base"]
    gamma, beta = params["gamma"], params["beta"]
    w_lin, b_lin = params["w_lin"], params["b_lin"]

    d_in, d_rep = w_base.shape
    n_classes = w_lin.shape[1]
    d_rep_pad = _round_up(d_rep, 128)
    ncls_pad = _round_up(n_classes, 128)

    # K tiling choice: keep the whole reduction resident if it fits VMEM.
    d_in_128 = _round_up(d_in, 128)
    full_k_bytes = (2 * d_in_128 * d_rep_pad * 2     # wb bf16 (2 bufs)
                    + 2 * 128 * d_in_128 * 4         # x tile, f32 worst case (2 bufs)
                    + 4 * 128 * d_rep_pad * 4)       # base out + stats + slack
    if full_k_bytes <= _VMEM_BUDGET:
        tk = d_in_128
    else:
        tk = 1024
    d_in_pad = _round_up(d_in, tk)

    wb_p = jnp.zeros((d_in_pad, d_rep_pad), bf16).at[:d_in, :d_rep].set(
        w_base.astype(bf16))
    bb_p = jnp.zeros((1, d_rep_pad), f32).at[:, :d_rep].set(
        b_base.reshape(1, d_rep).astype(f32))
    wl_p = jnp.zeros((d_rep_pad, ncls_pad), bf16).at[:d_rep, :n_classes].set(
        w_lin.astype(bf16))
    bl_p = jnp.full((1, ncls_pad), NEG_LARGE, f32).at[:, :n_classes].set(
        b_lin.reshape(1, n_classes).astype(f32))
    gamma_p = jnp.ones((1, d_rep_pad), f32).at[:, :d_rep].set(
        gamma.reshape(1, d_rep).astype(f32))
    beta_p = jnp.zeros((1, d_rep_pad), f32).at[:, :d_rep].set(
        beta.reshape(1, d_rep).astype(f32))

    return {
        "wb": wb_p, "bb": bb_p, "wl": wl_p, "bl": bl_p,
        "gamma": gamma_p, "beta": beta_p,
        "d_in": d_in, "d_rep": d_rep, "n_classes": n_classes,
        "d_in_pad": d_in_pad, "d_rep_pad": d_rep_pad, "ncls_pad": ncls_pad,
        "tk": tk,
    }


# ---------------------------------------------------------------------------
# Forward
# ---------------------------------------------------------------------------
def repnet_forward(x_nchw, prep):
    f32, bf16 = jnp.float32, jnp.bfloat16
    B = x_nchw.shape[0]
    d_in, d_rep, n_classes = prep["d_in"], prep["d_rep"], prep["n_classes"]
    d_in_pad, d_rep_pad, ncls_pad = (prep["d_in_pad"], prep["d_rep_pad"],
                                     prep["ncls_pad"])
    TK = prep["tk"]

    # --- B tiling: TB <= 128; aim for >= 2 B tiles (v7x two-TC sharding). ----
    if B >= 256:
        TB = 128
    elif B >= 32:
        TB = min(128, _round_up(_round_up(B, 16) // 2, 16))
    else:
        TB = _round_up(max(B, 1), 16)
    B_pad = _round_up(B, TB)
    nb = B_pad // TB
    nk = d_in_pad // TK

    # --- x: fast path avoids the XLA pad/cast pass entirely. -----------------
    x_flat = x_nchw.reshape(B, d_in)                 # matches torch .view(B, -1)
    if B_pad == B and d_in_pad == d_in:
        x_in = x_flat.astype(f32)                    # cast to bf16 in-kernel
    else:
        x_in = jnp.zeros((B_pad, d_in_pad), bf16).at[:B, :d_in].set(
            x_flat.astype(bf16))

    # --- pass 1: base matmul + ReLU + per-tile BN partial stats --------------
    base_pad, stats = pl.pallas_call(
        functools.partial(base_kernel, b_real=B),
        out_shape=[
            jax.ShapeDtypeStruct((B_pad, d_rep_pad), f32),
            jax.ShapeDtypeStruct((nb * 8, d_rep_pad), f32),
        ],
        grid=(nb, nk),
        in_specs=[
            pl.BlockSpec((TB, TK), lambda b, k: (b, k)),
            pl.BlockSpec((TK, d_rep_pad), lambda b, k: (k, 0)),
            pl.BlockSpec((1, d_rep_pad), lambda b, k: (0, 0)),
        ],
        out_specs=[
            pl.BlockSpec((TB, d_rep_pad), lambda b, k: (b, 0)),
            pl.BlockSpec((8, d_rep_pad), lambda b, k: (b, 0)),
        ],
        compiler_params=pltpu.CompilerParams(
            dimension_semantics=("parallel", "arbitrary"),
            vmem_limit_bytes=_VMEM_LIMIT),
    )(x_in, prep["wb"], prep["bb"])

    # --- tiny glue: fold full-batch BN (training mode) into scale/shift ------
    stats = stats.reshape(nb, 8, d_rep_pad)
    tot = jnp.sum(stats[:, 0, :], axis=0, keepdims=True)
    tot_sq = jnp.sum(stats[:, 1, :], axis=0, keepdims=True)
    mean = tot / B
    var = jnp.maximum(tot_sq / B - mean * mean, 0.0)     # biased batch variance
    inv_std = jax.lax.rsqrt(var + BN_EPS)
    scale = prep["gamma"] * inv_std
    shift = prep["beta"] - mean * scale

    # --- pass 2: BN affine + classifier + softmax -----------------------------
    fused_bytes = (2 * d_rep_pad * ncls_pad * 2      # wl bf16 (2 bufs)
                   + 2 * TB * ncls_pad * 4           # out f32 (2 bufs)
                   + 2 * TB * d_rep_pad * 4          # base in (2 bufs)
                   + 4 * ncls_pad * 4)
    if fused_bytes <= _VMEM_BUDGET:
        out_pad = pl.pallas_call(
            head_kernel,
            out_shape=jax.ShapeDtypeStruct((B_pad, ncls_pad), f32),
            grid=(nb,),
            in_specs=[
                pl.BlockSpec((TB, d_rep_pad), lambda b: (b, 0)),
                pl.BlockSpec((1, d_rep_pad), lambda b: (0, 0)),
                pl.BlockSpec((1, d_rep_pad), lambda b: (0, 0)),
                pl.BlockSpec((d_rep_pad, ncls_pad), lambda b: (0, 0)),
                pl.BlockSpec((1, ncls_pad), lambda b: (0, 0)),
            ],
            out_specs=pl.BlockSpec((TB, ncls_pad), lambda b: (b, 0)),
            compiler_params=pltpu.CompilerParams(
                dimension_semantics=("parallel",),
                vmem_limit_bytes=_VMEM_LIMIT),
        )(base_pad, scale, shift, prep["wl"], prep["bl"])
        out = out_pad[:B, :n_classes]
    else:
        # Class-tiled logits (keeps pass 2 under v7x's 64 MiB VMEM), softmax in XLA.
        TN = max(t for t in (2048, 1024, 512, 256, 128) if ncls_pad % t == 0)
        nc = ncls_pad // TN
        logits_pad = pl.pallas_call(
            logits_kernel,
            out_shape=jax.ShapeDtypeStruct((B_pad, ncls_pad), f32),
            grid=(nb, nc),
            in_specs=[
                pl.BlockSpec((TB, d_rep_pad), lambda b, c: (b, 0)),
                pl.BlockSpec((1, d_rep_pad), lambda b, c: (0, 0)),
                pl.BlockSpec((1, d_rep_pad), lambda b, c: (0, 0)),
                pl.BlockSpec((d_rep_pad, TN), lambda b, c: (0, c)),
                pl.BlockSpec((1, TN), lambda b, c: (0, c)),
            ],
            out_specs=pl.BlockSpec((TB, TN), lambda b, c: (b, c)),
            compiler_params=pltpu.CompilerParams(
                dimension_semantics=("parallel", "parallel"),
                vmem_limit_bytes=_VMEM_LIMIT),
        )(base_pad, scale, shift, prep["wl"], prep["bl"])
        out = jax.nn.softmax(logits_pad[:B, :n_classes], axis=1)

    base = base_pad[:B, :d_rep]
    return out, base


# ---------------------------------------------------------------------------
# Params / reference / self-test
# ---------------------------------------------------------------------------
def init_params(key, d_in, d_rep, n_classes):
    k1, k2, k3, k4 = jax.random.split(key, 4)
    lim_b = 1.0 / jnp.sqrt(d_in)
    lim_l = 1.0 / jnp.sqrt(d_rep)
    return {
        "w_base": jax.random.uniform(k1, (d_in, d_rep), jnp.float32, -lim_b, lim_b),
        "b_base": jax.random.uniform(k2, (1, d_rep), jnp.float32, -lim_b, lim_b),
        "gamma": jnp.ones((1, d_rep), jnp.float32),
        "beta": jnp.zeros((1, d_rep), jnp.float32),
        "w_lin": jax.random.uniform(k3, (d_rep, n_classes), jnp.float32, -lim_l, lim_l),
        "b_lin": jax.random.uniform(k4, (1, n_classes), jnp.float32, -lim_l, lim_l),
    }


def repnet_reference(x_nchw, params):
    B = x_nchw.shape[0]
    x = x_nchw.reshape(B, -1).astype(jnp.float32)
    base = x @ params["w_base"] + params["b_base"]
    r = jnp.maximum(base, 0.0)
    mean = jnp.mean(r, axis=0, keepdims=True)
    var = jnp.mean((r - mean) ** 2, axis=0, keepdims=True)
    norm = (r - mean) * jax.lax.rsqrt(var + BN_EPS) * params["gamma"] + params["beta"]
    logits = norm @ params["w_lin"] + params["b_lin"]
    return jax.nn.softmax(logits, axis=1), base


if __name__ == "__main__":
    key = jax.random.PRNGKey(0)
    kx, kp = jax.random.split(key)

    B, C, H, W = 2, 4, 16, 16
    d_rep, n_classes = 32, 8
    d_in = C * H * W

    x = jax.random.normal(kx, (B, C, H, W), jnp.float32)   # NCHW, like PyTorch
    params = init_params(kp, d_in, d_rep, n_classes)
    prep = prepare_params(params)                          # one-time pad/cast

    out, base = repnet_forward(x, prep)
    jax.block_until_ready((out, base))

    out_f32, base_f32 = repnet_reference(x, params)

    # shape / softmax / numerical sanity (bf16 MXU operands => loose tols)
    assert out.shape == (B, n_classes) and base.shape == (B, d_rep)
    assert jnp.allclose(jnp.sum(out, axis=1), 1.0, atol=5e-3)
    assert jnp.allclose(base, base_f32, atol=5e-2, rtol=5e-2)
    assert jnp.allclose(out, out_f32, atol=1e-1)

    print("KERNEL_OK")
</pallas_src>

<mosaic_0001>
module attributes {stable_mosaic.version = 11 : i64} {
  func.func @base_kernel(%arg0: i32, %arg1: i32, %arg2: memref<16x1024xbf16, #tpu.memory_space<vmem>>, %arg3: memref<1024x128xbf16, #tpu.memory_space<vmem>>, %arg4: memref<1x128xf32, #tpu.memory_space<vmem>>, %arg5: memref<16x128xf32, #tpu.memory_space<vmem>>, %arg6: memref<8x128xf32, #tpu.memory_space<vmem>>) attributes {dimension_semantics = [#tpu.dimension_semantics<parallel>, #tpu.dimension_semantics<arbitrary>], iteration_bounds = array<i64: 1, 1>, scalar_prefetch = 0 : i64, scratch_operands = 0 : i64, tpu.core_type = #tpu.core_type<tc>, window_params = [{transform_indices = @transform_0, window_bounds = array<i64: 16, 1024>}, {transform_indices = @transform_1, window_bounds = array<i64: 1024, 128>}, {pipeline_mode = #tpu.pipeline_mode<synchronous>, transform_indices = @transform_2, window_bounds = array<i64: 1, 128>}, {transform_indices = @transform_3, window_bounds = array<i64: 16, 128>}, {transform_indices = @transform_4, window_bounds = array<i64: 8, 128>}]} {
    %c16_i32 = arith.constant 16 : i32
    %0 = arith.muli %arg0, %c16_i32 : i32
    %c0_i32 = arith.constant 0 : i32
    %1 = arith.cmpi eq, %arg1, %c0_i32 : i32
    %2 = arith.extui %1 : i1 to i32
    %c0_i32_0 = arith.constant 0 : i32
    %3 = arith.cmpi ne, %2, %c0_i32_0 : i32
    scf.if %3 {
      %cst_10 = arith.constant 0.000000e+00 : f32
      %13 = vector.broadcast %cst_10 : f32 to vector<16x128xf32>
      %c0_11 = arith.constant 0 : index
      %c0_12 = arith.constant 0 : index
      %14 = vector.load %arg5[%c0_11, %c0_12] : memref<16x128xf32, #tpu.memory_space<vmem>>, vector<16x128xf32>
      tpu.vector_store %arg5[%c0_11, %c0_12], %13 {strides = array<i32>} : memref<16x128xf32, #tpu.memory_space<vmem>>, vector<16x128xf32>,
    } else {
    }
    %c0 = arith.constant 0 : index
    %c0_1 = arith.constant 0 : index
    %4 = vector.load %arg5[%c0, %c0_1] : memref<16x128xf32, #tpu.memory_space<vmem>>, vector<16x128xf32>
    %c0_2 = arith.constant 0 : index
    %c0_3 = arith.constant 0 : index
    %5 = vector.load %arg2[%c0_2, %c0_3] : memref<16x1024xbf16, #tpu.memory_space<vmem>>, vector<16x1024xbf16>
    %c0_4 = arith.constant 0 : index
    %c0_5 = arith.constant 0 : index
    %6 = vector.load %arg3[%c0_4, %c0_5] : memref<1024x128xbf16, #tpu.memory_space<vmem>>, vector<1024x128xbf16>
    %cst = arith.constant dense<0.000000e+00> : vector<16x128xf32>
    %7 = tpu.matmul %5, %6, %cst {dimension_numbers = #tpu.dot_dimension_numbers<[1], [0], [0], [1], [0, 0, 1, 1], [], []>} : vector<16x1024xbf16>, vector<1024x128xbf16>, vector<16x128xf32> -> vector<16x128xf32>
    %8 = arith.addf %4, %7 : vector<16x128xf32>
    %c0_6 = arith.constant 0 : index
    %c0_7 = arith.constant 0 : index
    %9 = vector.load %arg5[%c0_6, %c0_7] : memref<16x128xf32, #tpu.memory_space<vmem>>, vector<16x128xf32>
    tpu.vector_store %arg5[%c0_6, %c0_7], %8 {strides = array<i32>} : memref<16x128xf32, #tpu.memory_space<vmem>>, vector<16x128xf32>,
    %c0_i32_8 = arith.constant 0 : i32
    %10 = arith.cmpi eq, %arg1, %c0_i32_8 : i32
    %11 = arith.extui %10 : i1 to i32
    %c0_i32_9 = arith.constant 0 : i32
    %12 = arith.cmpi ne, %11, %c0_i32_9 : i32
    scf.if %12 {
      %c0_10 = arith.constant 0 : index
      %c0_11 = arith.constant 0 : index
      %13 = vector.load %arg5[%c0_10, %c0_11] : memref<16x128xf32, #tpu.memory_space<vmem>>, vector<16x128xf32>
      %c0_12 = arith.constant 0 : index
      %c0_13 = arith.constant 0 : index
      %14 = vector.load %arg4[%c0_12, %c0_13] : memref<1x128xf32, #tpu.memory_space<vmem>>, vector<1x128xf32>
      %15 = vector.broadcast %14 : vector<1x128xf32> to vector<16x128xf32>
      %16 = arith.addf %13, %15 : vector<16x128xf32>
      %c0_14 = arith.constant 0 : index
      %c0_15 = arith.constant 0 : index
      %17 = vector.load %arg5[%c0_14, %c0_15] : memref<16x128xf32, #tpu.memory_space<vmem>>, vector<16x128xf32>
      tpu.vector_store %arg5[%c0_14, %c0_15], %16 {strides = array<i32>} : memref<16x128xf32, #tpu.memory_space<vmem>>, vector<16x128xf32>,
      %cst_16 = arith.constant 0.000000e+00 : f32
      %18 = vector.broadcast %cst_16 : f32 to vector<16x128xf32>
      %19 = arith.maximumf %16, %18 : vector<16x128xf32>
      %20 = tpu.iota {dimensions = array<i32: 0>} : vector<16x1xi32>
      %21 = vector.broadcast %0 : i32 to vector<16x1xi32>
      %22 = arith.addi %21, %20 : vector<16x1xi32>
      %c2_i32 = arith.constant 2 : i32
      %23 = vector.broadcast %c2_i32 : i32 to vector<16x1xi32>
      %24 = arith.cmpi slt, %22, %23 : vector<16x1xi32>
      %25 = arith.extui %24 : vector<16x1xi1> to vector<16x1xi32>
      %26 = arith.sitofp %25 : vector<16x1xi32> to vector<16x1xf32>
      %27 = vector.broadcast %26 : vector<16x1xf32> to vector<16x128xf32>
      %28 = arith.mulf %19, %27 : vector<16x128xf32>
      %cst_17 = arith.constant dense<0.000000e+00> : vector<128xf32>
      %29 = vector.multi_reduction <add>, %28, %cst_17 [0] : vector<16x128xf32> to vector<128xf32>
      %30 = vector.shape_cast %29 : vector<128xf32> to vector<1x128xf32>
      %31 = arith.mulf %28, %19 : vector<16x128xf32>
      %cst_18 = arith.constant dense<0.000000e+00> : vector<128xf32>
      %32 = vector.multi_reduction <add>, %31, %cst_18 [0] : vector<16x128xf32> to vector<128xf32>
      %33 = vector.shape_cast %32 : vector<128xf32> to vector<1x128xf32>
      %34 = tpu.iota {dimensions = array<i32: 0>} : vector<8x128xi32>
      %c0_i32_19 = arith.constant 0 : i32
      %35 = vector.broadcast %c0_i32_19 : i32 to vector<8x128xi32>
      %36 = arith.cmpi eq, %34, %35 : vector<8x128xi32>
      %c1_i32 = arith.constant 1 : i32
      %37 = vector.broadcast %c1_i32 : i32 to vector<8x128xi32>
      %38 = arith.cmpi eq, %34, %37 : vector<8x128xi32>
      %cst_20 = arith.constant 0.000000e+00 : f32
      %39 = vector.shape_cast %33 : vector<1x128xf32> to vector<1x128xf32>
      %40 = vector.broadcast %39 : vector<1x128xf32> to vector<8x128xf32>
      %41 = vector.broadcast %cst_20 : f32 to vector<8x128xf32>
      %42 = arith.select %38, %40, %41 : vector<8x128xi1>, vector<8x128xf32>
      %43 = vector.shape_cast %30 : vector<1x128xf32> to vector<1x128xf32>
      %44 = vector.broadcast %43 : vector<1x128xf32> to vector<8x128xf32>
      %45 = arith.select %36, %44, %42 : vector<8x128xi1>, vector<8x128xf32>
      %c0_21 = arith.constant 0 : index
      %c0_22 = arith.constant 0 : index
      %46 = vector.load %arg6[%c0_21, %c0_22] : memref<8x128xf32, #tpu.memory_space<vmem>>, vector<8x128xf32>
      tpu.vector_store %arg6[%c0_21, %c0_22], %45 {strides = array<i32>} : memref<8x128xf32, #tpu.memory_space<vmem>>, vector<8x128xf32>,
    } else {
    }
    return
  }
  func.func @transform_0(%arg0: i32, %arg1: i32) -> (i32, i32) {
    %c0_i32 = arith.constant 0 : i32
    return %arg0, %arg1 : i32, i32
  }
  func.func @transform_1(%arg0: i32, %arg1: i32) -> (i32, i32) {
    %c0_i32 = arith.constant 0 : i32
    %c0_i32_0 = arith.constant 0 : i32
    return %arg1, %c0_i32 : i32, i32
  }
  func.func @transform_2(%arg0: i32, %arg1: i32) -> (i32, i32) {
    %c0_i32 = arith.constant 0 : i32
    %c0_i32_0 = arith.constant 0 : i32
    %c0_i32_1 = arith.constant 0 : i32
    return %c0_i32, %c0_i32_0 : i32, i32
  }
  func.func @transform_3(%arg0: i32, %arg1: i32) -> (i32, i32) {
    %c0_i32 = arith.constant 0 : i32
    %c0_i32_0 = arith.constant 0 : i32
    return %arg0, %c0_i32 : i32, i32
  }
  func.func @transform_4(%arg0: i32, %arg1: i32) -> (i32, i32) {
    %c0_i32 = arith.constant 0 : i32
    %c0_i32_0 = arith.constant 0 : i32
    return %arg0, %c0_i32 : i32, i32
  }
}

</mosaic_0001>

<llo_original>
// kernel: tpu_custom_call.1
$region0: #{tpu_custom_call.1}
  #allocation0 [shape = 'u32[]', space=smem, size = 0x4, offset = 0x4, fixed_abs, tag = 'smem constant byte address 0x4 - core index']
  #allocation1 [shape = 'u32[144,128]{1,0:T(1,128)}', space=vmem, size = 0x12000, scoped, tag = 'internal scratch']
  %s0 = inlined_call_operand.hbm [shape: bf16[16,1024], index: 0, kind: input, shape index: {}]
  %s1 = inlined_call_operand.hbm [shape: bf16[1024,128], index: 1, kind: input, shape index: {}]
  %s2 = inlined_call_operand.vmem [shape: f32[1,128], index: 2, kind: input, shape index: {}]
  %s3 = inlined_call_operand.hbm [shape: f32[16,128], index: 3, kind: output, shape index: {0}]
  %s4 = inlined_call_operand.hbm [shape: f32[8,128], index: 4, kind: output, shape index: {1}]
  %5 = xla_tuple %s3, %s4
  %s6 = sld [smem:[#allocation0]]
  $region46: #{tpu_custom_call.1} parent=0
    _
  %s8 = ssub.s32 1, %s6
  %s9 = scalar_select 0, %s8, %s6
  $region1: #{tpu_custom_call.1} parent=0
    #allocation2 [shape = 'u8[32768]{0}', space=vmem, size = 0x8000, scoped, tag = 'input window, operand 0, single buffered']
    #allocation3 [shape = 's32[1]{0}', space=sflag, size = 0x4, scoped, tag = 'scoped memory for tpu_custom_call.1']
    #allocation4 [shape = 's32[1]{0}', space=sflag, size = 0x4, scoped, tag = 'scoped memory for tpu_custom_call.1']
    #allocation5 [shape = 'u8[262144]{0}', space=vmem, size = 0x40000, scoped, tag = 'input window, operand 1, single buffered']
    #allocation6 [shape = 's32[1]{0}', space=sflag, size = 0x4, scoped, tag = 'scoped memory for tpu_custom_call.1']
    #allocation7 [shape = 'u8[8192]{0}', space=vmem, size = 0x2000, scoped, tag = 'output window, operand 0, single buffered']
    #allocation8 [shape = 'u8[4096]{0}', space=vmem, size = 0x1000, scoped, tag = 'output window, operand 1, single buffered']
    #allocation9 [shape = 's32[1]{0}', space=sflag, size = 0x4, scoped, tag = 'scoped memory for tpu_custom_call.1']
    %10 = vsyncpa [#allocation3], 0
    %11 = vsyncpa [#allocation6], 0
    %12 = vsyncpa [#allocation4], 0
    %13 = vsyncpa [#allocation9], 0
    // Predicated region
    $region2: #{tpu_custom_call.1} parent=1 // pred_check
      _
    $region3: #{tpu_custom_call.1} parent=1 // pred_check_branch
      %15 = sbr.rel (0) target = $region5
    $region4: #{tpu_custom_call.1} parent=1 // pred_region
      %s17 = ssub.s32 1024, 1024
      %18 = vsyncadd [#allocation3], %s17
      %s19 = sshll.u32 [#allocation2], 4
      %s20 = int_to_ptr.vmem [resolvable:$true] %s19
      %25 = dma.hbm_to_vmem [thread:$0]  %s0, 1024, %s20, [#allocation3], 512, 512, 32
    $region5: #{tpu_custom_call.1} parent=1 // pred_fallthru
      _
    // Predicated region
    $region6: #{tpu_custom_call.1} parent=1 // pred_check
      _
    $region7: #{tpu_custom_call.1} parent=1 // pred_check_branch
      %27 = sbr.rel (0) target = $region9
    $region8: #{tpu_custom_call.1} parent=1 // pred_region
      %s29 = ssub.s32 8192, 8192
      %30 = vsyncadd [#allocation6], %s29
      %s31 = sshll.u32 [#allocation5], 4
      %s32 = int_to_ptr.vmem [resolvable:$true] %s31
      %37 = dma.hbm_to_vmem [thread:$0]  %s1, 8192, %s32, [#allocation6], 64, 64, 4
    $region9: #{tpu_custom_call.1} parent=1 // pred_fallthru
      _
    // Predicated region
    $region10: #{tpu_custom_call.1} parent=1 // pred_check
      _
    $region11: #{tpu_custom_call.1} parent=1 // pred_check_branch
      %39 = sbr.rel (0) target = $region13
    $region12: #{tpu_custom_call.1} parent=1 // pred_region
      _
    $region13: #{tpu_custom_call.1} parent=1 // pred_fallthru
      _
    // Predicated region
    $region14: #{tpu_custom_call.1} parent=1 // pred_check
      _
    $region15: #{tpu_custom_call.1} parent=1 // pred_check_branch
      %41 = sbr.rel (0) target = $region17
    $region16: #{tpu_custom_call.1} parent=1 // pred_region
      %42 = dma.done [#allocation3], 1024
    $region17: #{tpu_custom_call.1} parent=1 // pred_fallthru
      _
    // Predicated region
    $region18: #{tpu_custom_call.1} parent=1 // pred_check
      _
    $region19: #{tpu_custom_call.1} parent=1 // pred_check_branch
      %44 = sbr.rel (0) target = $region21
    $region20: #{tpu_custom_call.1} parent=1 // pred_region
      %45 = dma.done [#allocation6], 8192
    $region21: #{tpu_custom_call.1} parent=1 // pred_fallthru
      _
    %s47 = smul.u32 0, 16
    %p48 = scmp.eq.s32.totalorder 0, 0
    // Predicated region
    $region22: #{tpu_custom_call.1} parent=1 // pred_check
      %p49 = pneg %p48
    $region23: #{tpu_custom_call.1} parent=1 // pred_check_branch
      %51 = sbr.rel (%p49) target = $region25
    $region24: #{tpu_custom_call.1} parent=1 // pred_region
      %52 = vst [vmem:[#allocation7] sm:$0xff] 0.0
      %53 = vst [vmem:[#allocation7 + $0x8] sm:$0xff] 0.0
    $region25: #{tpu_custom_call.1} parent=1 // pred_fallthru
      _
    %v54 = vld [vmem:[#allocation7] sm:$0xff]
    %v55 = vld [vmem:[#allocation7 + $0x8] sm:$0xff]
    %v56 = vld [vmem:[#allocation2] sm:$0xff]
    %v57 = vld [vmem:[#allocation2 + $0x8] sm:$0xff]
    %v58 = vld [vmem:[#allocation2 + $0x10] sm:$0xff]
    %v59 = vld [vmem:[#allocation2 + $0x18] sm:$0xff]
    %v60 = vld [vmem:[#allocation2 + $0x20] sm:$0xff]
    %v61 = vld [vmem:[#allocation2 + $0x28] sm:$0xff]
    %v62 = vld [vmem:[#allocation2 + $0x30] sm:$0xff]
    %v63 = vld [vmem:[#allocation2 + $0x38] sm:$0xff]
    %v64 = vld [vmem:[#allocation5] sm:$0xf]
    %v65 = vld [vmem:[#allocation5 + $0x4] sm:$0xf]
    %v66 = vld [vmem:[#allocation5 + $0x8] sm:$0xf]
    %v67 = vld [vmem:[#allocation5 + $0xc] sm:$0xf]
    %v68 = vld [vmem:[#allocation5 + $0x10] sm:$0xf]
    %v69 = vld [vmem:[#allocation5 + $0x14] sm:$0xf]
    %v70 = vld [vmem:[#allocation5 + $0x18] sm:$0xf]
    %v71 = vld [vmem:[#allocation5 + $0x1c] sm:$0xf]
    %v72 = vld [vmem:[#allocation5 + $0x20] sm:$0xf]
    %v73 = vld [vmem:[#allocation5 + $0x24] sm:$0xf]
    %v74 = vld [vmem:[#allocation5 + $0x28] sm:$0xf]
    %v75 = vld [vmem:[#allocation5 + $0x2c] sm:$0xf]
    %v76 = vld [vmem:[#allocation5 + $0x30] sm:$0xf]
    %v77 = vld [vmem:[#allocation5 + $0x34] sm:$0xf]
    %v78 = vld [vmem:[#allocation5 + $0x38] sm:$0xf]
    %v79 = vld [vmem:[#allocation5 + $0x3c] sm:$0xf]
    %v80 = vld [vmem:[#allocation5 + $0x40] sm:$0xf]
    %v81 = vld [vmem:[#allocation5 + $0x44] sm:$0xf]
    %v82 = vld [vmem:[#allocation5 + $0x48] sm:$0xf]
    %v83 = vld [vmem:[#allocation5 + $0x4c] sm:$0xf]
    %v84 = vld [vmem:[#allocation5 + $0x50] sm:$0xf]
    %v85 = vld [vmem:[#allocation5 + $0x54] sm:$0xf]
    %v86 = vld [vmem:[#allocation5 + $0x58] sm:$0xf]
    %v87 = vld [vmem:[#allocation5 + $0x5c] sm:$0xf]
    %v88 = vld [vmem:[#allocation5 + $0x60] sm:$0xf]
    %v89 = vld [vmem:[#allocation5 + $0x64] sm:$0xf]
    %v90 = vld [vmem:[#allocation5 + $0x68] sm:$0xf]
    %v91 = vld [vmem:[#allocation5 + $0x6c] sm:$0xf]
    %v92 = vld [vmem:[#allocation5 + $0x70] sm:$0xf]
    %v93 = vld [vmem:[#allocation5 + $0x74] sm:$0xf]
    %v94 = vld [vmem:[#allocation5 + $0x78] sm:$0xf]
    %v95 = vld [vmem:[#allocation5 + $0x7c] sm:$0xf]
    %v96 = vld [vmem:[#allocation5 + $0x80] sm:$0xf]
    %v97 = vld [vmem:[#allocation5 + $0x84] sm:$0xf]
    %v98 = vld [vmem:[#allocation5 + $0x88] sm:$0xf]
    %v99 = vld [vmem:[#allocation5 + $0x8c] sm:$0xf]
    %v100 = vld [vmem:[#allocation5 + $0x90] sm:$0xf]
    %v101 = vld [vmem:[#allocation5 + $0x94] sm:$0xf]
    %v102 = vld [vmem:[#allocation5 + $0x98] sm:$0xf]
    %v103 = vld [vmem:[#allocation5 + $0x9c] sm:$0xf]
    %v104 = vld [vmem:[#allocation5 + $0xa0] sm:$0xf]
    %v105 = vld [vmem:[#allocation5 + $0xa4] sm:$0xf]
    %v106 = vld [vmem:[#allocation5 + $0xa8] sm:$0xf]
    %v107 = vld [vmem:[#allocation5 + $0xac] sm:$0xf]
    %v108 = vld [vmem:[#allocation5 + $0xb0] sm:$0xf]
    %v109 = vld [vmem:[#allocation5 + $0xb4] sm:$0xf]
    %v110 = vld [vmem:[#allocation5 + $0xb8] sm:$0xf]
    %v111 = vld [vmem:[#allocation5 + $0xbc] sm:$0xf]
    %v112 = vld [vmem:[#allocation5 + $0xc0] sm:$0xf]
    %v113 = vld [vmem:[#allocation5 + $0xc4] sm:$0xf]
    %v114 = vld [vmem:[#allocation5 + $0xc8] sm:$0xf]
    %v115 = vld [vmem:[#allocation5 + $0xcc] sm:$0xf]
    %v116 = vld [vmem:[#allocation5 + $0xd0] sm:$0xf]
    %v117 = vld [vmem:[#allocation5 + $0xd4] sm:$0xf]
    %v118 = vld [vmem:[#allocation5 + $0xd8] sm:$0xf]
    %v119 = vld [vmem:[#allocation5 + $0xdc] sm:$0xf]
    %v120 = vld [vmem:[#allocation5 + $0xe0] sm:$0xf]
    %v121 = vld [vmem:[#allocation5 + $0xe4] sm:$0xf]
    %v122 = vld [vmem:[#allocation5 + $0xe8] sm:$0xf]
    %v123 = vld [vmem:[#allocation5 + $0xec] sm:$0xf]
    %v124 = vld [vmem:[#allocation5 + $0xf0] sm:$0xf]
    %v125 = vld [vmem:[#allocation5 + $0xf4] sm:$0xf]
    %v126 = vld [vmem:[#allocation5 + $0xf8] sm:$0xf]
    %v127 = vld [vmem:[#allocation5 + $0xfc] sm:$0xf]
    %v128 = vld [vmem:[#allocation5 + $0x100] sm:$0xf]
    %v129 = vld [vmem:[#allocation5 + $0x104] sm:$0xf]
    %v130 = vld [vmem:[#allocation5 + $0x108] sm:$0xf]
    %v131 = vld [vmem:[#allocation5 + $0x10c] sm:$0xf]
    %v132 = vld [vmem:[#allocation5 + $0x110] sm:$0xf]
    %v133 = vld [vmem:[#allocation5 + $0x114] sm:$0xf]
    %v134 = vld [vmem:[#allocation5 + $0x118] sm:$0xf]
    %v135 = vld [vmem:[#allocation5 + $0x11c] sm:$0xf]
    %v136 = vld [vmem:[#allocation5 + $0x120] sm:$0xf]
    %v137 = vld [vmem:[#allocation5 + $0x124] sm:$0xf]
    %v138 = vld [vmem:[#allocation5 + $0x128] sm:$0xf]
    %v139 = vld [vmem:[#allocation5 + $0x12c] sm:$0xf]
    %v140 = vld [vmem:[#allocation5 + $0x130] sm:$0xf]
    %v141 = vld [vmem:[#allocation5 + $0x134] sm:$0xf]
    %v142 = vld [vmem:[#allocation5 + $0x138] sm:$0xf]
    %v143 = vld [vmem:[#allocation5 + $0x13c] sm:$0xf]
    %v144 = vld [vmem:[#allocation5 + $0x140] sm:$0xf]
    %v145 = vld [vmem:[#allocation5 + $0x144] sm:$0xf]
    %v146 = vld [vmem:[#allocation5 + $0x148] sm:$0xf]
    %v147 = vld [vmem:[#allocation5 + $0x14c] sm:$0xf]
    %v148 = vld [vmem:[#allocation5 + $0x150] sm:$0xf]
    %v149 = vld [vmem:[#allocation5 + $0x154] sm:$0xf]
    %v150 = vld [vmem:[#allocation5 + $0x158] sm:$0xf]
    %v151 = vld [vmem:[#allocation5 + $0x15c] sm:$0xf]
    %v152 = vld [vmem:[#allocation5 + $0x160] sm:$0xf]
    %v153 = vld [vmem:[#allocation5 + $0x164] sm:$0xf]
    %v154 = vld [vmem:[#allocation5 + $0x168] sm:$0xf]
    %v155 = vld [vmem:[#allocation5 + $0x16c] sm:$0xf]
    %v156 = vld [vmem:[#allocation5 + $0x170] sm:$0xf]
    %v157 = vld [vmem:[#allocation5 + $0x174] sm:$0xf]
    %v158 = vld [vmem:[#allocation5 + $0x178] sm:$0xf]
    %v159 = vld [vmem:[#allocation5 + $0x17c] sm:$0xf]
    %v160 = vld [vmem:[#allocation5 + $0x180] sm:$0xf]
    %v161 = vld [vmem:[#allocation5 + $0x184] sm:$0xf]
    %v162 = vld [vmem:[#allocation5 + $0x188] sm:$0xf]
    %v163 = vld [vmem:[#allocation5 + $0x18c] sm:$0xf]
    %v164 = vld [vmem:[#allocation5 + $0x190] sm:$0xf]
    %v165 = vld [vmem:[#allocation5 + $0x194] sm:$0xf]
    %v166 = vld [vmem:[#allocation5 + $0x198] sm:$0xf]
    %v167 = vld [vmem:[#allocation5 + $0x19c] sm:$0xf]
    %v168 = vld [vmem:[#allocation5 + $0x1a0] sm:$0xf]
    %v169 = vld [vmem:[#allocation5 + $0x1a4] sm:$0xf]
    %v170 = vld [vmem:[#allocation5 + $0x1a8] sm:$0xf]
    %v171 = vld [vmem:[#allocation5 + $0x1ac] sm:$0xf]
    %v172 = vld [vmem:[#allocation5 + $0x1b0] sm:$0xf]
    %v173 = vld [vmem:[#allocation5 + $0x1b4] sm:$0xf]
    %v174 = vld [vmem:[#allocation5 + $0x1b8] sm:$0xf]
    %v175 = vld [vmem:[#allocation5 + $0x1bc] sm:$0xf]
    %v176 = vld [vmem:[#allocation5 + $0x1c0] sm:$0xf]
    %v177 = vld [vmem:[#allocation5 + $0x1c4] sm:$0xf]
    %v178 = vld [vmem:[#allocation5 + $0x1c8] sm:$0xf]
    %v179 = vld [vmem:[#allocation5 + $0x1cc] sm:$0xf]
    %v180 = vld [vmem:[#allocation5 + $0x1d0] sm:$0xf]
    %v181 = vld [vmem:[#allocation5 + $0x1d4] sm:$0xf]
    %v182 = vld [vmem:[#allocation5 + $0x1d8] sm:$0xf]
    %v183 = vld [vmem:[#allocation5 + $0x1dc] sm:$0xf]
    %v184 = vld [vmem:[#allocation5 + $0x1e0] sm:$0xf]
    %v185 = vld [vmem:[#allocation5 + $0x1e4] sm:$0xf]
    %v186 = vld [vmem:[#allocation5 + $0x1e8] sm:$0xf]
    %v187 = vld [vmem:[#allocation5 + $0x1ec] sm:$0xf]
    %v188 = vld [vmem:[#allocation5 + $0x1f0] sm:$0xf]
    %v189 = vld [vmem:[#allocation5 + $0x1f4] sm:$0xf]
    %v190 = vld [vmem:[#allocation5 + $0x1f8] sm:$0xf]
    %v191 = vld [vmem:[#allocation5 + $0x1fc] sm:$0xf]
    %v200 = vunpack.c.l.b16 %v56
    %v201 = vunpack.c.h.b16 %v56
    %v202 = vunpack.c.l.b16 %v57
    %v203 = vunpack.c.h.b16 %v57
    %v204 = vunpack.c.l.b16 %v58
    %v205 = vunpack.c.h.b16 %v58
    %v206 = vunpack.c.l.b16 %v59
    %v207 = vunpack.c.h.b16 %v59
    %v208 = vunpack.c.l.b16 %v60
    %v209 = vunpack.c.h.b16 %v60
    %v210 = vunpack.c.l.b16 %v61
    %v211 = vunpack.c.h.b16 %v61
    %v212 = vunpack.c.l.b16 %v62
    %v213 = vunpack.c.h.b16 %v62
    %v214 = vunpack.c.l.b16 %v63
    %v215 = vunpack.c.h.b16 %v63
    %v216 = vpack.c.b16 %v208, %v200
    %v217 = vpack.c.b16 %v209, %v201
    %v218 = vpack.c.b16 %v210, %v202
    %v219 = vpack.c.b16 %v211, %v203
    %v220 = vpack.c.b16 %v212, %v204
    %v221 = vpack.c.b16 %v213, %v205
    %v222 = vpack.c.b16 %v214, %v206
    %v223 = vpack.c.b16 %v215, %v207
    %v360 = vunpack.c.l.b16 %v64
    %v361 = vunpack.c.l.b16 %v65
    %v362 = vunpack.c.l.b16 %v66
    %v363 = vunpack.c.l.b16 %v67
    %v364 = vunpack.c.l.b16 %v68
    %v365 = vunpack.c.l.b16 %v69
    %v366 = vunpack.c.l.b16 %v70
    %v367 = vunpack.c.l.b16 %v71
    %v368 = vunpack.c.l.b16 %v72
    %v369 = vunpack.c.l.b16 %v73
    %v370 = vunpack.c.l.b16 %v74
    %v371 = vunpack.c.l.b16 %v75
    %v372 = vunpack.c.l.b16 %v76
    %v373 = vunpack.c.l.b16 %v77
    %v374 = vunpack.c.l.b16 %v78
    %v375 = vunpack.c.l.b16 %v79
    %v376 = vunpack.c.l.b16 %v80
    %v377 = vunpack.c.l.b16 %v81
    %v378 = vunpack.c.l.b16 %v82
    %v379 = vunpack.c.l.b16 %v83
    %v380 = vunpack.c.l.b16 %v84
    %v381 = vunpack.c.l.b16 %v85
    %v382 = vunpack.c.l.b16 %v86
    %v383 = vunpack.c.l.b16 %v87
    %v384 = vunpack.c.l.b16 %v88
    %v385 = vunpack.c.l.b16 %v89
    %v386 = vunpack.c.l.b16 %v90
    %v387 = vunpack.c.l.b16 %v91
    %v388 = vunpack.c.l.b16 %v92
    %v389 = vunpack.c.l.b16 %v93
    %v390 = vunpack.c.l.b16 %v94
    %v391 = vunpack.c.l.b16 %v95
    %v392 = vunpack.c.l.b16 %v96
    %v393 = vunpack.c.l.b16 %v97
    %v394 = vunpack.c.l.b16 %v98
    %v395 = vunpack.c.l.b16 %v99
    %v396 = vunpack.c.l.b16 %v100
    %v397 = vunpack.c.l.b16 %v101
    %v398 = vunpack.c.l.b16 %v102
    %v399 = vunpack.c.l.b16 %v103
    %v400 = vunpack.c.l.b16 %v104
    %v401 = vunpack.c.l.b16 %v105
    %v402 = vunpack.c.l.b16 %v106
    %v403 = vunpack.c.l.b16 %v107
    %v404 = vunpack.c.l.b16 %v108
    %v405 = vunpack.c.l.b16 %v109
    %v406 = vunpack.c.l.b16 %v110
    %v407 = vunpack.c.l.b16 %v111
    %v408 = vunpack.c.l.b16 %v112
    %v409 = vunpack.c.l.b16 %v113
    %v410 = vunpack.c.l.b16 %v114
    %v411 = vunpack.c.l.b16 %v115
    %v412 = vunpack.c.l.b16 %v116
    %v413 = vunpack.c.l.b16 %v117
    %v414 = vunpack.c.l.b16 %v118
    %v415 = vunpack.c.l.b16 %v119
    %v416 = vunpack.c.l.b16 %v120
    %v417 = vunpack.c.l.b16 %v121
    %v418 = vunpack.c.l.b16 %v122
    %v419 = vunpack.c.l.b16 %v123
    %v420 = vunpack.c.l.b16 %v124
    %v421 = vunpack.c.l.b16 %v125
    %v422 = vunpack.c.l.b16 %v126
    %v423 = vunpack.c.l.b16 %v127
    %v424 = vunpack.c.l.b16 %v128
    %v425 = vunpack.c.l.b16 %v129
    %v426 = vunpack.c.l.b16 %v130
    %v427 = vunpack.c.l.b16 %v131
    %v428 = vunpack.c.l.b16 %v132
    %v429 = vunpack.c.l.b16 %v133
    %v430 = vunpack.c.l.b16 %v134
    %v431 = vunpack.c.l.b16 %v135
    %v432 = vunpack.c.l.b16 %v136
    %v433 = vunpack.c.l.b16 %v137
    %v434 = vunpack.c.l.b16 %v138
    %v435 = vunpack.c.l.b16 %v139
    %v436 = vunpack.c.l.b16 %v140
    %v437 = vunpack.c.l.b16 %v141
    %v438 = vunpack.c.l.b16 %v142
    %v439 = vunpack.c.l.b16 %v143
    %v440 = vunpack.c.l.b16 %v144
    %v441 = vunpack.c.l.b16 %v145
    %v442 = vunpack.c.l.b16 %v146
    %v443 = vunpack.c.l.b16 %v147
    %v444 = vunpack.c.l.b16 %v148
    %v445 = vunpack.c.l.b16 %v149
    %v446 = vunpack.c.l.b16 %v150
    %v447 = vunpack.c.l.b16 %v151
    %v448 = vunpack.c.l.b16 %v152
    %v449 = vunpack.c.l.b16 %v153
    %v450 = vunpack.c.l.b16 %v154
    %v451 = vunpack.c.l.b16 %v155
    %v452 = vunpack.c.l.b16 %v156
    %v453 = vunpack.c.l.b16 %v157
    %v454 = vunpack.c.l.b16 %v158
    %v455 = vunpack.c.l.b16 %v159
    %v456 = vunpack.c.l.b16 %v160
    %v457 = vunpack.c.l.b16 %v161
    %v458 = vunpack.c.l.b16 %v162
    %v459 = vunpack.c.l.b16 %v163
    %v460 = vunpack.c.l.b16 %v164
    %v461 = vunpack.c.l.b16 %v165
    %v462 = vunpack.c.l.b16 %v166
    %v463 = vunpack.c.l.b16 %v167
    %v464 = vunpack.c.l.b16 %v168
    %v465 = vunpack.c.l.b16 %v169
    %v466 = vunpack.c.l.b16 %v170
    %v467 = vunpack.c.l.b16 %v171
    %v468 = vunpack.c.l.b16 %v172
    %v469 = vunpack.c.l.b16 %v173
    %v470 = vunpack.c.l.b16 %v174
    %v471 = vunpack.c.l.b16 %v175
    %v472 = vunpack.c.l.b16 %v176
    %v473 = vunpack.c.l.b16 %v177
    %v474 = vunpack.c.l.b16 %v178
    %v475 = vunpack.c.l.b16 %v179
    %v476 = vunpack.c.l.b16 %v180
    %v477 = vunpack.c.l.b16 %v181
    %v478 = vunpack.c.l.b16 %v182
    %v479 = vunpack.c.l.b16 %v183
    %v480 = vunpack.c.l.b16 %v184
    %v481 = vunpack.c.l.b16 %v185
    %v482 = vunpack.c.l.b16 %v186
    %v483 = vunpack.c.l.b16 %v187
    %v484 = vunpack.c.l.b16 %v188
    %v485 = vunpack.c.l.b16 %v189
    %v486 = vunpack.c.l.b16 %v190
    %v487 = vunpack.c.l.b16 %v191
    %v488 = vpack.c.b16 %v361, %v360
    %v489 = vpack.c.b16 %v363, %v362
    %v490 = vpack.c.b16 %v365, %v364
    %v491 = vpack.c.b16 %v367, %v366
    %v492 = vpack.c.b16 %v369, %v368
    %v493 = vpack.c.b16 %v371, %v370
    %v494 = vpack.c.b16 %v373, %v372
    %v495 = vpack.c.b16 %v375, %v374
    %v496 = vpack.c.b16 %v377, %v376
    %v497 = vpack.c.b16 %v379, %v378
    %v498 = vpack.c.b16 %v381, %v380
    %v499 = vpack.c.b16 %v383, %v382
    %v500 = vpack.c.b16 %v385, %v384
    %v501 = vpack.c.b16 %v387, %v386
    %v502 = vpack.c.b16 %v389, %v388
    %v503 = vpack.c.b16 %v391, %v390
    %v504 = vpack.c.b16 %v393, %v392
    %v505 = vpack.c.b16 %v395, %v394
    %v506 = vpack.c.b16 %v397, %v396
    %v507 = vpack.c.b16 %v399, %v398
    %v508 = vpack.c.b16 %v401, %v400
    %v509 = vpack.c.b16 %v403, %v402
    %v510 = vpack.c.b16 %v405, %v404
    %v511 = vpack.c.b16 %v407, %v406
    %v512 = vpack.c.b16 %v409, %v408
    %v513 = vpack.c.b16 %v411, %v410
    %v514 = vpack.c.b16 %v413, %v412
    %v515 = vpack.c.b16 %v415, %v414
    %v516 = vpack.c.b16 %v417, %v416
    %v517 = vpack.c.b16 %v419, %v418
    %v518 = vpack.c.b16 %v421, %v420
    %v519 = vpack.c.b16 %v423, %v422
    %v520 = vpack.c.b16 %v425, %v424
    %v521 = vpack.c.b16 %v427, %v426
    %v522 = vpack.c.b16 %v429, %v428
    %v523 = vpack.c.b16 %v431, %v430
    %v524 = vpack.c.b16 %v433, %v432
    %v525 = vpack.c.b16 %v435, %v434
    %v526 = vpack.c.b16 %v437, %v436
    %v527 = vpack.c.b16 %v439, %v438
    %v528 = vpack.c.b16 %v441, %v440
    %v529 = vpack.c.b16 %v443, %v442
    %v530 = vpack.c.b16 %v445, %v444
    %v531 = vpack.c.b16 %v447, %v446
    %v532 = vpack.c.b16 %v449, %v448
    %v533 = vpack.c.b16 %v451, %v450
    %v534 = vpack.c.b16 %v453, %v452
    %v535 = vpack.c.b16 %v455, %v454
    %v536 = vpack.c.b16 %v457, %v456
    %v537 = vpack.c.b16 %v459, %v458
    %v538 = vpack.c.b16 %v461, %v460
    %v539 = vpack.c.b16 %v463, %v462
    %v540 = vpack.c.b16 %v465, %v464
    %v541 = vpack.c.b16 %v467, %v466
    %v542 = vpack.c.b16 %v469, %v468
    %v543 = vpack.c.b16 %v471, %v470
    %v544 = vpack.c.b16 %v473, %v472
    %v545 = vpack.c.b16 %v475, %v474
    %v546 = vpack.c.b16 %v477, %v476
    %v547 = vpack.c.b16 %v479, %v478
    %v548 = vpack.c.b16 %v481, %v480
    %v549 = vpack.c.b16 %v483, %v482
    %v550 = vpack.c.b16 %v485, %v484
    %v551 = vpack.c.b16 %v487, %v486
    %616 = vmatprep.subr.bf16.mxu0 0
    %617 = vmatpush1.bf16.msra.mxu0 %v495
    %618 = vmatprep.subr.bf16.mxu0 0
    %619 = vmatpush1.bf16.msra.mxu0 %v494
    %620 = vmatprep.subr.bf16.mxu0 0
    %621 = vmatpush1.bf16.msra.mxu0 %v493
    %622 = vmatprep.subr.bf16.mxu0 0
    %623 = vmatpush1.bf16.msra.mxu0 %v492
    %624 = vmatprep.subr.bf16.mxu0 0
    %625 = vmatpush1.bf16.msra.mxu0 %v491
    %626 = vmatprep.subr.bf16.mxu0 0
    %627 = vmatpush1.bf16.msra.mxu0 %v490
    %628 = vmatprep.subr.bf16.mxu0 0
    %629 = vmatpush1.bf16.msra.mxu0 %v489
    %630 = vmatprep.subr.bf16.mxu0 0
    %631 = vmatpush1.bf16.msra.mxu0 %v488
    %632 = vmatprep.subr.bf16.mxu0 0
    %633 = vmatpush2.bf16.msra.mxu0 %v503
    %634 = vmatprep.subr.bf16.mxu0 0
    %635 = vmatpush2.bf16.msra.mxu0 %v502
    %636 = vmatprep.subr.bf16.mxu0 0
    %637 = vmatpush2.bf16.msra.mxu0 %v501
    %638 = vmatprep.subr.bf16.mxu0 0
    %639 = vmatpush2.bf16.msra.mxu0 %v500
    %640 = vmatprep.subr.bf16.mxu0 0
    %641 = vmatpush2.bf16.msra.mxu0 %v499
    %642 = vmatprep.subr.bf16.mxu0 0
    %643 = vmatpush2.bf16.msra.mxu0 %v498
    %644 = vmatprep.subr.bf16.mxu0 0
    %645 = vmatpush2.bf16.msra.mxu0 %v497
    %646 = vmatprep.subr.bf16.mxu0 0
    %647 = vmatpush2.bf16.msra.mxu0 %v496
    %648 = vmatprep.mubr.bf16.mxu0 %v217
    %649 = vmatmul.mubr.bf16.gmra.mxu0 %v216
    %v650 = vpop.f32.mrf.mxu0
    %v651 = vadd.f32 0.0, %v650
    %v652 = vpop.f32.mrf.mxu0
    %v653 = vpop.f32.mrf.mxu0
    %v654 = vadd.f32 0.0, %v653
    %v655 = vpop.f32.mrf.mxu0
    %656 = vdwg.mxu0
    %657 = vmatprep.subr.bf16.mxu0 0
    %658 = vmatpush1.bf16.msra.mxu0 %v511
    %659 = vmatprep.subr.bf16.mxu0 0
    %660 = vmatpush1.bf16.msra.mxu0 %v510
    %661 = vmatprep.subr.bf16.mxu0 0
    %662 = vmatpush1.bf16.msra.mxu0 %v509
    %663 = vmatprep.subr.bf16.mxu0 0
    %664 = vmatpush1.bf16.msra.mxu0 %v508
    %665 = vmatprep.subr.bf16.mxu0 0
    %666 = vmatpush1.bf16.msra.mxu0 %v507
    %667 = vmatprep.subr.bf16.mxu0 0
    %668 = vmatpush1.bf16.msra.mxu0 %v506
    %669 = vmatprep.subr.bf16.mxu0 0
    %670 = vmatpush1.bf16.msra.mxu0 %v505
    %671 = vmatprep.subr.bf16.mxu0 0
    %672 = vmatpush1.bf16.msra.mxu0 %v504
    %673 = vmatprep.subr.bf16.mxu0 0
    %674 = vmatpush2.bf16.msra.mxu0 %v519
    %675 = vmatprep.subr.bf16.mxu0 0
    %676 = vmatpush2.bf16.msra.mxu0 %v518
    %677 = vmatprep.subr.bf16.mxu0 0
    %678 = vmatpush2.bf16.msra.mxu0 %v517
    %679 = vmatprep.subr.bf16.mxu0 0
    %680 = vmatpush2.bf16.msra.mxu0 %v516
    %681 = vmatprep.subr.bf16.mxu0 0
    %682 = vmatpush2.bf16.msra.mxu0 %v515
    %683 = vmatprep.subr.bf16.mxu0 0
    %684 = vmatpush2.bf16.msra.mxu0 %v514
    %685 = vmatprep.subr.bf16.mxu0 0
    %686 = vmatpush2.bf16.msra.mxu0 %v513
    %687 = vmatprep.subr.bf16.mxu0 0
    %688 = vmatpush2.bf16.msra.mxu0 %v512
    %689 = vmatprep.mubr.bf16.mxu0 %v219
    %690 = vmatmul.mubr.bf16.gmra.mxu0 %v218
    %v691 = vpop.f32.mrf.mxu0
    %v692 = vadd.f32 %v651, %v691
    %v693 = vpop.f32.mrf.mxu0
    %v694 = vpop.f32.mrf.mxu0
    %v695 = vadd.f32 %v654, %v694
    %v696 = vpop.f32.mrf.mxu0
    %697 = vdwg.mxu0
    %698 = vmatprep.subr.bf16.mxu0 0
    %699 = vmatpush1.bf16.msra.mxu0 %v527
    %700 = vmatprep.subr.bf16.mxu0 0
    %701 = vmatpush1.bf16.msra.mxu0 %v526
    %702 = vmatprep.subr.bf16.mxu0 0
    %703 = vmatpush1.bf16.msra.mxu0 %v525
    %704 = vmatprep.subr.bf16.mxu0 0
    %705 = vmatpush1.bf16.msra.mxu0 %v524
    %706 = vmatprep.subr.bf16.mxu0 0
    %707 = vmatpush1.bf16.msra.mxu0 %v523
    %708 = vmatprep.subr.bf16.mxu0 0
    %709 = vmatpush1.bf16.msra.mxu0 %v522
    %710 = vmatprep.subr.bf16.mxu0 0
    %711 = vmatpush1.bf16.msra.mxu0 %v521
    %712 = vmatprep.subr.bf16.mxu0 0
    %713 = vmatpush1.bf16.msra.mxu0 %v520
    %714 = vmatprep.subr.bf16.mxu0 0
    %715 = vmatpush2.bf16.msra.mxu0 %v535
    %716 = vmatprep.subr.bf16.mxu0 0
    %717 = vmatpush2.bf16.msra.mxu0 %v534
    %718 = vmatprep.subr.bf16.mxu0 0
    %719 = vmatpush2.bf16.msra.mxu0 %v533
    %720 = vmatprep.subr.bf16.mxu0 0
    %721 = vmatpush2.bf16.msra.mxu0 %v532
    %722 = vmatprep.subr.bf16.mxu0 0
    %723 = vmatpush2.bf16.msra.mxu0 %v531
    %724 = vmatprep.subr.bf16.mxu0 0
    %725 = vmatpush2.bf16.msra.mxu0 %v530
    %726 = vmatprep.subr.bf16.mxu0 0
    %727 = vmatpush2.bf16.msra.mxu0 %v529
    %728 = vmatprep.subr.bf16.mxu0 0
    %729 = vmatpush2.bf16.msra.mxu0 %v528
    %730 = vmatprep.mubr.bf16.mxu0 %v221
    %731 = vmatmul.mubr.bf16.gmra.mxu0 %v220
    %v732 = vpop.f32.mrf.mxu0
    %v733 = vadd.f32 %v692, %v732
    %v734 = vpop.f32.mrf.mxu0
    %v735 = vpop.f32.mrf.mxu0
    %v736 = vadd.f32 %v695, %v735
    %v737 = vpop.f32.mrf.mxu0
    %738 = vdwg.mxu0
    %739 = vmatprep.subr.bf16.mxu0 0
    %740 = vmatpush1.bf16.msra.mxu0 %v543
    %741 = vmatprep.subr.bf16.mxu0 0
    %742 = vmatpush1.bf16.msra.mxu0 %v542
    %743 = vmatprep.subr.bf16.mxu0 0
    %744 = vmatpush1.bf16.msra.mxu0 %v541
    %745 = vmatprep.subr.bf16.mxu0 0
    %746 = vmatpush1.bf16.msra.mxu0 %v540
    %747 = vmatprep.subr.bf16.mxu0 0
    %748 = vmatpush1.bf16.msra.mxu0 %v539
    %749 = vmatprep.subr.bf16.mxu0 0
    %750 = vmatpush1.bf16.msra.mxu0 %v538
    %751 = vmatprep.subr.bf16.mxu0 0
    %752 = vmatpush1.bf16.msra.mxu0 %v537
    %753 = vmatprep.subr.bf16.mxu0 0
    %754 = vmatpush1.bf16.msra.mxu0 %v536
    %755 = vmatprep.subr.bf16.mxu0 0
    %756 = vmatpush2.bf16.msra.mxu0 %v551
    %757 = vmatprep.subr.bf16.mxu0 0
    %758 = vmatpush2.bf16.msra.mxu0 %v550
    %759 = vmatprep.subr.bf16.mxu0 0
    %760 = vmatpush2.bf16.msra.mxu0 %v549
    %761 = vmatprep.subr.bf16.mxu0 0
    %762 = vmatpush2.bf16.msra.mxu0 %v548
    %763 = vmatprep.subr.bf16.mxu0 0
    %764 = vmatpush2.bf16.msra.mxu0 %v547
    %765 = vmatprep.subr.bf16.mxu0 0
    %766 = vmatpush2.bf16.msra.mxu0 %v546
    %767 = vmatprep.subr.bf16.mxu0 0
    %768 = vmatpush2.bf16.msra.mxu0 %v545
    %769 = vmatprep.subr.bf16.mxu0 0
    %770 = vmatpush2.bf16.msra.mxu0 %v544
    %771 = vmatprep.mubr.bf16.mxu0 %v223
    %772 = vmatmul.mubr.bf16.gmra.mxu0 %v222
    %v773 = vpop.f32.mrf.mxu0
    %v774 = vadd.f32 %v733, %v773
    %v775 = vpop.f32.mrf.mxu0
    %v776 = vpop.f32.mrf.mxu0
    %v777 = vadd.f32 %v736, %v776
    %v778 = vpop.f32.mrf.mxu0
    %779 = vdwg.mxu0
    %v780 = vadd.f32 %v54, %v774
    %v781 = vadd.f32 %v55, %v777
    %782 = vst [vmem:[#allocation7] sm:$0xff] %v780
    %783 = vst [vmem:[#allocation7 + $0x8] sm:$0xff] %v781
    // Predicated region
    $region26: #{tpu_custom_call.1} parent=1 // pred_check
      %p784 = pneg %p48
    $region27: #{tpu_custom_call.1} parent=1 // pred_check_branch
      %786 = sbr.rel (%p784) target = $region29
    $region28: #{tpu_custom_call.1} parent=1 // pred_region
      %v787 = vld [vmem:[#allocation7] sm:$0xff]
      %v788 = vld [vmem:[#allocation7 + $0x8] sm:$0xff]
      %v789 = vld [vmem:[%s2] sm:$0x1]
      %v791 = vlaneseq
      %v792 = vshrl.u32 %v791, 7
      %v793 = vsub.s32 0, %v792
      %v794 = vrot.slane %v789, %v793
      %v796 = vadd.f32 %v787, %v794
      %v797 = vadd.f32 %v788, %v794
      %798 = vst [vmem:[#allocation7] sm:$0xff] %v796
      %799 = vst [vmem:[#allocation7 + $0x8] sm:$0xff] %v797
      %v800 = vmax.f32 %v796, 0.0
      %v801 = vmax.f32 %v797, 0.0
      %v802 = vlaneseq
      %v803 = vshrl.u32 %v802, 7
      %v804 = vadd.s32 %v803, 8
      %v805 = vstv %s47
      %v806 = vadd.s32 %v805, %v803
      %v807 = vadd.s32 %v805, %v804
      %vm808 = vcmp.lt.s32.totalorder %v806, 2
      %vm809 = vcmp.lt.s32.totalorder %v807, 2
      %v810 = vsel %vm808, 1, 0
      %v811 = vsel %vm809, 1, 0
      %v812 = vcvt.s32.f32 %v810
      %v813 = vcvt.s32.f32 %v811
      %v814 = vmul.f32 %v800, %v812
      %v815 = vmul.f32 %v801, %v813
      %v816 = vadd.f32 %v814, %v815
      %v817 = vrot.slane %v816, 4
      %v818 = vadd.f32 %v816, %v817
      %v819 = vrot.slane %v818, 2
      %v820 = vadd.f32 %v818, %v819
      %v821 = vrot.slane %v820, 1
      %v822 = vadd.f32 %v820, %v821
      %v823 = vmul.f32 %v814, %v800
      %v824 = vmul.f32 %v815, %v801
      %v825 = vadd.f32 %v823, %v824
      %v826 = vrot.slane %v825, 4
      %v827 = vadd.f32 %v825, %v826
      %v828 = vrot.slane %v827, 2
      %v829 = vadd.f32 %v827, %v828
      %v830 = vrot.slane %v829, 1
      %v831 = vadd.f32 %v829, %v830
      %vm832 = vcmp.eq.s32.totalorder %v803, 0
      %vm833 = vcmp.eq.s32.totalorder %v803, 1
      %v834 = vsel %vm833, %v831, 0.0
      %v835 = vsel %vm832, %v822, %v834
      %836 = vst [vmem:[#allocation8] sm:$0xff] %v835
    $region29: #{tpu_custom_call.1} parent=1 // pred_fallthru
      _
    // Predicated region
    $region30: #{tpu_custom_call.1} parent=1 // pred_check
      _
    $region31: #{tpu_custom_call.1} parent=1 // pred_check_branch
      %838 = sbr.rel (0) target = $region33
    $region32: #{tpu_custom_call.1} parent=1 // pred_region
      %s840 = ssub.s32 256, 256
      %841 = vsyncadd [#allocation4], %s840
      %s842 = sshll.u32 [#allocation7], 4
      %s843 = int_to_ptr.vmem [resolvable:$true] %s842
      %848 = dma.vmem_to_hbm [thread:$0]  %s843, 256, %s3, [#allocation4], 128, 128, 8
    $region33: #{tpu_custom_call.1} parent=1 // pred_fallthru
      _
    // Predicated region
    $region34: #{tpu_custom_call.1} parent=1 // pred_check
      _
    $region35: #{tpu_custom_call.1} parent=1 // pred_check_branch
      %850 = sbr.rel (0) target = $region37
    $region36: #{tpu_custom_call.1} parent=1 // pred_region
      %s852 = ssub.s32 128, 128
      %853 = vsyncadd [#allocation9], %s852
      %s855 = sshll.u32 [#allocation8], 4
      %s856 = int_to_ptr.vmem [resolvable:$true] %s855
      %858 = dma.vmem_to_hbm [thread:$0]  %s856, 128, %s4, [#allocation9]
    $region37: #{tpu_custom_call.1} parent=1 // pred_fallthru
      _
    // Predicated region
    $region38: #{tpu_custom_call.1} parent=1 // pred_check
      _
    $region39: #{tpu_custom_call.1} parent=1 // pred_check_branch
      %860 = sbr.rel (0) target = $region41
    $region40: #{tpu_custom_call.1} parent=1 // pred_region
      %861 = dma.done [#allocation4], 256
    $region41: #{tpu_custom_call.1} parent=1 // pred_fallthru
      _
    // Predicated region
    $region42: #{tpu_custom_call.1} parent=1 // pred_check
      _
    $region43: #{tpu_custom_call.1} parent=1 // pred_check_branch
      %863 = sbr.rel (0) target = $region45
    $region44: #{tpu_custom_call.1} parent=1 // pred_region
      %864 = dma.done [#allocation9], 128
    $region45: #{tpu_custom_call.1} parent=1 // pred_fallthru
      _
    %865 = vsyncpa [#allocation3], 1
    %866 = vsyncpa [#allocation6], 1
    %867 = vsyncpa [#allocation4], 1
    %868 = vsyncpa [#allocation9], 1

</llo_original>
